<compile_context>
chip_gen: v7x
topology: tpu7x:2x2x1
jax: 0.10.0
libtpu: 0.0.40
codegen_flags: <defaults>
</compile_context>

<pallas_src>
import functools

import jax
import jax.numpy as jnp
from jax import lax
from jax.experimental import pallas as pl
from jax.experimental.pallas import tpu as pltpu


def _dsconv_kernel(x_ref, dww_ref, pwwT_ref, fb_ref, o_ref, *, W, HW):
    # x_ref:    (1, Cin, H*W)    input image, spatial flattened onto lanes
    # dww_ref:  (Cin, 9)         depthwise 3x3 taps, tap t = ki*3 + kj
    # pwwT_ref: (TCout, Cin)     pointwise weights, already transposed
    # fb_ref:   (TCout, 1)       fused bias = pw_w @ dw_b + pw_b
    # o_ref:    (1, TCout, H*W)  full-resolution output slab (valid region sliced in wrapper)
    #
    # Depthwise accumulation is kept in f32 (no-op upcast for f32 inputs; required on v5e,
    # which has no bf16 VALU).  For bf16 inputs the MXU operands could stay bf16, but with
    # K = Cin this small the dot is negligible either way.
    x = x_ref[0].astype(jnp.float32)          # (Cin, HW)
    w = dww_ref[...].astype(jnp.float32)      # (Cin, 9)

    # 3x3 depthwise, stride 1, valid padding.  Output flat position p = i*W + j needs
    # x[p + ki*W + kj]; a circular left shift by s = ki*W + kj (done as roll by HW - s)
    # brings that tap into place.  Wrap-around only pollutes positions that lie outside
    # the valid (Hout, Wout) region, which the wrapper discards.
    acc = x * w[:, 0:1]                        # tap (0, 0): shift 0
    for ki in range(3):
        for kj in range(3):
            if ki == 0 and kj == 0:
                continue
            s = ki * W + kj
            t = ki * 3 + kj
            xs = pltpu.roll(x, shift=(HW - s) % HW, axis=1)   # xs[p] = x[(p + s) % HW]
            acc = acc + xs * w[:, t:t + 1]

    # Pointwise 1x1 conv == one clean 2-D matmul over channels (MXU), fused bias added once.
    out = jnp.dot(pwwT_ref[...].astype(jnp.float32), acc,
                  preferred_element_type=jnp.float32)          # (TCout, HW)
    out = out + fb_ref[...].astype(jnp.float32)
    o_ref[0] = out.astype(o_ref.dtype)


def depthwise_separable_conv(x_nchw, dw_w, dw_b, pw_w, pw_b, *, cout_tile=256):
    """x_nchw: (N, Cin, H, W); dw_w: (Cin, 1, 3, 3); dw_b: (Cin,);
    pw_w: (Cout, Cin, 1, 1); pw_b: (Cout,).  Returns (N, Cout, H-2, W-2) in NCHW."""
    N, Cin, H, W = x_nchw.shape
    Cout = pw_w.shape[0]
    Hout, Wout = H - 2, W - 2
    HW = H * W

    # Cheap one-time re-layout of parameters (wrapper-side, outside the kernel).
    x_flat = x_nchw.reshape(N, Cin, HW)                      # contiguous -> free reshape
    dww = dw_w.reshape(Cin, 9)                               # flat (Cin, 9) taps
    pwwT = pw_w[:, :, 0, 0]                                  # (Cout, Cin)
    fused_b = (pwwT.astype(jnp.float32) @ dw_b.astype(jnp.float32)
               + pw_b.astype(jnp.float32)).reshape(Cout, 1)  # dw bias folded into pw bias

    # Cout tiling: one tile for small Cout, 256-wide tiles for large Cout (second
    # parallel grid axis -> better megacore sharding on v7x even for small batch).
    tcout = Cout if Cout <= cout_tile else cout_tile
    ct = pl.cdiv(Cout, tcout)

    # TODO(synk): for very large H*W, add a spatial grid axis with a 2-row halo
    # (element-indexed input blocks) so the per-step input block stays VMEM-bounded.
    out_flat = pl.pallas_call(
        functools.partial(_dsconv_kernel, W=W, HW=HW),
        out_shape=jax.ShapeDtypeStruct((N, Cout, HW), x_nchw.dtype),
        grid_spec=pltpu.PrefetchScalarGridSpec(
            num_scalar_prefetch=0,
            grid=(N, ct),
            in_specs=[
                # x depends only on the batch index -> DMA'd once per image and kept
                # resident across the inner Cout-tile axis.
                pl.BlockSpec((1, Cin, HW), lambda b, co: (b, 0, 0)),
                pl.BlockSpec((Cin, 9), lambda b, co: (0, 0)),
                pl.BlockSpec((tcout, Cin), lambda b, co: (co, 0)),
                pl.BlockSpec((tcout, 1), lambda b, co: (co, 0)),
            ],
            out_specs=pl.BlockSpec((1, tcout, HW), lambda b, co: (b, co, 0)),
        ),
        compiler_params=pltpu.CompilerParams(
            dimension_semantics=("parallel", "parallel"),
            vmem_limit_bytes=32 * 1024 * 1024,
        ),
    )(x_flat, dww, pwwT, fused_b)

    # Un-flatten and slice the valid (Hout, Wout) region; stays NCHW.
    return out_flat.reshape(N, Cout, H, W)[:, :, :Hout, :Wout]


def _reference(x, dw_w, dw_b, pw_w, pw_b):
    """Pure-JAX reference matching torch.nn.Conv2d semantics (NCHW)."""
    Cin = x.shape[1]
    dn = lax.conv_dimension_numbers(x.shape, dw_w.shape, ("NCHW", "OIHW", "NCHW"))
    dw = lax.conv_general_dilated(x, dw_w, (1, 1), "VALID",
                                  dimension_numbers=dn, feature_group_count=Cin)
    dw = dw + dw_b.reshape(1, -1, 1, 1)
    dn2 = lax.conv_dimension_numbers(dw.shape, pw_w.shape, ("NCHW", "OIHW", "NCHW"))
    pw = lax.conv_general_dilated(dw, pw_w, (1, 1), "VALID", dimension_numbers=dn2)
    return pw + pw_b.reshape(1, -1, 1, 1)


if __name__ == "__main__":
    key = jax.random.PRNGKey(0)
    k_x, k_dw, k_db, k_pw, k_pb = jax.random.split(key, 5)

    N, Cin, Cout, H, W = 2, 4, 8, 16, 16
    x = jax.random.normal(k_x, (N, Cin, H, W), dtype=jnp.float32)

    # Deterministic synthetic parameters (shapes per nn.Conv2d in the module's __init__).
    dw_w = 0.1 * jax.random.normal(k_dw, (Cin, 1, 3, 3), dtype=jnp.float32)
    dw_b = 0.1 * jax.random.normal(k_db, (Cin,), dtype=jnp.float32)
    pw_w = 0.1 * jax.random.normal(k_pw, (Cout, Cin, 1, 1), dtype=jnp.float32)
    pw_b = 0.1 * jax.random.normal(k_pb, (Cout,), dtype=jnp.float32)

    out = jax.block_until_ready(depthwise_separable_conv(x, dw_w, dw_b, pw_w, pw_b))
    ref = jax.block_until_ready(_reference(x, dw_w, dw_b, pw_w, pw_b))

    assert out.shape == (N, Cout, H - 2, W - 2), out.shape
    err = float(jnp.max(jnp.abs(out - ref)))
    assert jnp.allclose(out, ref, atol=3e-5, rtol=3e-5), err
    print("KERNEL_OK")
</pallas_src>

<mosaic_0001>
module attributes {stable_mosaic.version = 11 : i64} {
  func.func @_dsconv_kernel(%arg0: i32, %arg1: i32, %arg2: memref<1x4x256xf32, #tpu.memory_space<vmem>>, %arg3: memref<4x9xf32, #tpu.memory_space<vmem>>, %arg4: memref<8x4xf32, #tpu.memory_space<vmem>>, %arg5: memref<8x1xf32, #tpu.memory_space<vmem>>, %arg6: memref<1x8x256xf32, #tpu.memory_space<vmem>>) attributes {dimension_semantics = [#tpu.dimension_semantics<parallel>, #tpu.dimension_semantics<parallel>], iteration_bounds = array<i64: 2, 1>, scalar_prefetch = 0 : i64, scratch_operands = 0 : i64, tpu.core_type = #tpu.core_type<tc>, window_params = [{transform_indices = @transform_0, window_bounds = array<i64: 1, 4, 256>}, {pipeline_mode = #tpu.pipeline_mode<synchronous>, transform_indices = @transform_1, window_bounds = array<i64: 4, 9>}, {transform_indices = @transform_2, window_bounds = array<i64: 8, 4>}, {transform_indices = @transform_3, window_bounds = array<i64: 8, 1>}, {transform_indices = @transform_4, window_bounds = array<i64: 1, 8, 256>}]} {
    %c0 = arith.constant 0 : index
    %c0_0 = arith.constant 0 : index
    %c0_1 = arith.constant 0 : index
    %0 = vector.load %arg2[%c0, %c0_0, %c0_1] : memref<1x4x256xf32, #tpu.memory_space<vmem>>, vector<1x4x256xf32>
    %1 = vector.shape_cast %0 : vector<1x4x256xf32> to vector<4x256xf32>
    %c0_2 = arith.constant 0 : index
    %c0_3 = arith.constant 0 : index
    %2 = vector.load %arg3[%c0_2, %c0_3] : memref<4x9xf32, #tpu.memory_space<vmem>>, vector<4x9xf32>
    %3 = vector.extract_strided_slice %2 {offsets = [0, 0], sizes = [4, 1], strides = [1, 1]} : vector<4x9xf32> to vector<4x1xf32>
    %4 = vector.broadcast %3 : vector<4x1xf32> to vector<4x256xf32>
    %5 = arith.mulf %1, %4 : vector<4x256xf32>
    %c255_i32 = arith.constant 255 : i32
    %6 = tpu.dynamic_rotate %1 by %c255_i32 dim 1 : vector<4x256xf32>, i32 -> vector<4x256xf32>
    %7 = vector.extract_strided_slice %2 {offsets = [0, 1], sizes = [4, 1], strides = [1, 1]} : vector<4x9xf32> to vector<4x1xf32>
    %8 = vector.broadcast %7 : vector<4x1xf32> to vector<4x256xf32>
    %9 = arith.mulf %6, %8 : vector<4x256xf32>
    %10 = arith.addf %5, %9 : vector<4x256xf32>
    %c254_i32 = arith.constant 254 : i32
    %11 = tpu.dynamic_rotate %1 by %c254_i32 dim 1 : vector<4x256xf32>, i32 -> vector<4x256xf32>
    %12 = vector.extract_strided_slice %2 {offsets = [0, 2], sizes = [4, 1], strides = [1, 1]} : vector<4x9xf32> to vector<4x1xf32>
    %13 = vector.broadcast %12 : vector<4x1xf32> to vector<4x256xf32>
    %14 = arith.mulf %11, %13 : vector<4x256xf32>
    %15 = arith.addf %10, %14 : vector<4x256xf32>
    %c240_i32 = arith.constant 240 : i32
    %16 = tpu.dynamic_rotate %1 by %c240_i32 dim 1 : vector<4x256xf32>, i32 -> vector<4x256xf32>
    %17 = vector.extract_strided_slice %2 {offsets = [0, 3], sizes = [4, 1], strides = [1, 1]} : vector<4x9xf32> to vector<4x1xf32>
    %18 = vector.broadcast %17 : vector<4x1xf32> to vector<4x256xf32>
    %19 = arith.mulf %16, %18 : vector<4x256xf32>
    %20 = arith.addf %15, %19 : vector<4x256xf32>
    %c239_i32 = arith.constant 239 : i32
    %21 = tpu.dynamic_rotate %1 by %c239_i32 dim 1 : vector<4x256xf32>, i32 -> vector<4x256xf32>
    %22 = vector.extract_strided_slice %2 {offsets = [0, 4], sizes = [4, 1], strides = [1, 1]} : vector<4x9xf32> to vector<4x1xf32>
    %23 = vector.broadcast %22 : vector<4x1xf32> to vector<4x256xf32>
    %24 = arith.mulf %21, %23 : vector<4x256xf32>
    %25 = arith.addf %20, %24 : vector<4x256xf32>
    %c238_i32 = arith.constant 238 : i32
    %26 = tpu.dynamic_rotate %1 by %c238_i32 dim 1 : vector<4x256xf32>, i32 -> vector<4x256xf32>
    %27 = vector.extract_strided_slice %2 {offsets = [0, 5], sizes = [4, 1], strides = [1, 1]} : vector<4x9xf32> to vector<4x1xf32>
    %28 = vector.broadcast %27 : vector<4x1xf32> to vector<4x256xf32>
    %29 = arith.mulf %26, %28 : vector<4x256xf32>
    %30 = arith.addf %25, %29 : vector<4x256xf32>
    %c224_i32 = arith.constant 224 : i32
    %31 = tpu.dynamic_rotate %1 by %c224_i32 dim 1 : vector<4x256xf32>, i32 -> vector<4x256xf32>
    %32 = vector.extract_strided_slice %2 {offsets = [0, 6], sizes = [4, 1], strides = [1, 1]} : vector<4x9xf32> to vector<4x1xf32>
    %33 = vector.broadcast %32 : vector<4x1xf32> to vector<4x256xf32>
    %34 = arith.mulf %31, %33 : vector<4x256xf32>
    %35 = arith.addf %30, %34 : vector<4x256xf32>
    %c223_i32 = arith.constant 223 : i32
    %36 = tpu.dynamic_rotate %1 by %c223_i32 dim 1 : vector<4x256xf32>, i32 -> vector<4x256xf32>
    %37 = vector.extract_strided_slice %2 {offsets = [0, 7], sizes = [4, 1], strides = [1, 1]} : vector<4x9xf32> to vector<4x1xf32>
    %38 = vector.broadcast %37 : vector<4x1xf32> to vector<4x256xf32>
    %39 = arith.mulf %36, %38 : vector<4x256xf32>
    %40 = arith.addf %35, %39 : vector<4x256xf32>
    %c222_i32 = arith.constant 222 : i32
    %41 = tpu.dynamic_rotate %1 by %c222_i32 dim 1 : vector<4x256xf32>, i32 -> vector<4x256xf32>
    %42 = vector.extract_strided_slice %2 {offsets = [0, 8], sizes = [4, 1], strides = [1, 1]} : vector<4x9xf32> to vector<4x1xf32>
    %43 = vector.broadcast %42 : vector<4x1xf32> to vector<4x256xf32>
    %44 = arith.mulf %41, %43 : vector<4x256xf32>
    %45 = arith.addf %40, %44 : vector<4x256xf32>
    %c0_4 = arith.constant 0 : index
    %c0_5 = arith.constant 0 : index
    %46 = vector.load %arg4[%c0_4, %c0_5] : memref<8x4xf32, #tpu.memory_space<vmem>>, vector<8x4xf32>
    %cst = arith.constant dense<0.000000e+00> : vector<8x256xf32>
    %47 = tpu.matmul %46, %45, %cst {dimension_numbers = #tpu.dot_dimension_numbers<[1], [0], [0], [1], [0, 0, 1, 1], [], []>} : vector<8x4xf32>, vector<4x256xf32>, vector<8x256xf32> -> vector<8x256xf32>
    %c0_6 = arith.constant 0 : index
    %c0_7 = arith.constant 0 : index
    %48 = vector.load %arg5[%c0_6, %c0_7] : memref<8x1xf32, #tpu.memory_space<vmem>>, vector<8x1xf32>
    %49 = vector.broadcast %48 : vector<8x1xf32> to vector<8x256xf32>
    %50 = arith.addf %47, %49 : vector<8x256xf32>
    %c0_8 = arith.constant 0 : index
    %c0_9 = arith.constant 0 : index
    %c0_10 = arith.constant 0 : index
    %51 = vector.load %arg6[%c0_8, %c0_9, %c0_10] : memref<1x8x256xf32, #tpu.memory_space<vmem>>, vector<1x8x256xf32>
    %52 = vector.shape_cast %51 : vector<1x8x256xf32> to vector<8x256xf32>
    %53 = vector.shape_cast %50 : vector<8x256xf32> to vector<1x8x256xf32>
    tpu.vector_store %arg6[%c0_8, %c0_9, %c0_10], %53 {strides = array<i32>} : memref<1x8x256xf32, #tpu.memory_space<vmem>>, vector<1x8x256xf32>,
    return
  }
  func.func @transform_0(%arg0: i32, %arg1: i32) -> (i32, i32, i32) {
    %c0_i32 = arith.constant 0 : i32
    %c0_i32_0 = arith.constant 0 : i32
    %c0_i32_1 = arith.constant 0 : i32
    return %arg0, %c0_i32, %c0_i32_0 : i32, i32, i32
  }
  func.func @transform_1(%arg0: i32, %arg1: i32) -> (i32, i32) {
    %c0_i32 = arith.constant 0 : i32
    %c0_i32_0 = arith.constant 0 : i32
    %c0_i32_1 = arith.constant 0 : i32
    return %c0_i32, %c0_i32_0 : i32, i32
  }
  func.func @transform_2(%arg0: i32, %arg1: i32) -> (i32, i32) {
    %c0_i32 = arith.constant 0 : i32
    %c0_i32_0 = arith.constant 0 : i32
    return %arg1, %c0_i32 : i32, i32
  }
  func.func @transform_3(%arg0: i32, %arg1: i32) -> (i32, i32) {
    %c0_i32 = arith.constant 0 : i32
    %c0_i32_0 = arith.constant 0 : i32
    return %arg1, %c0_i32 : i32, i32
  }
  func.func @transform_4(%arg0: i32, %arg1: i32) -> (i32, i32, i32) {
    %c0_i32 = arith.constant 0 : i32
    %c0_i32_0 = arith.constant 0 : i32
    return %arg0, %arg1, %c0_i32 : i32, i32, i32
  }
}

</mosaic_0001>

<llo_original>
// kernel: tpu_custom_call.1
$region0: #{tpu_custom_call.1}
  #allocation0 [shape = 'u32[]', space=smem, size = 0x4, offset = 0x4, fixed_abs, tag = 'smem constant byte address 0x4 - core index']
  #allocation1 [shape = 'u32[144,128]{1,0:T(1,128)}', space=vmem, size = 0x12000, scoped, tag = 'internal scratch']
  %s0 = inlined_call_operand.vmem [shape: f32[2,4,256], index: 0, kind: input, shape index: {}]
  %s1 = inlined_call_operand.vmem [shape: f32[4,9], index: 1, kind: input, shape index: {}]
  %s2 = inlined_call_operand.vmem [shape: f32[8,4], index: 2, kind: input, shape index: {}]
  %s3 = inlined_call_operand.vmem [shape: f32[8,1], index: 3, kind: input, shape index: {}]
  %s4 = inlined_call_operand.hbm [shape: f32[2,8,256], index: 4, kind: output, shape index: {}]
  %s5 = sld [smem:[#allocation0]]
  $region49: #{tpu_custom_call.1} parent=0
    _
  %s7 = ssub.s32 1, %s5
  %s8 = scalar_select 0, %s7, %s5
  $region1: #{tpu_custom_call.1} parent=0
    #allocation2 [shape = 'u8[16384]{0}', space=vmem, size = 0x4000, scoped, tag = 'output window, operand 0']
    #allocation3 [shape = 's32[2]{0}', space=sflag, size = 0x8, scoped, tag = 'scoped memory for tpu_custom_call.1']
    %9 = vsyncpa [#allocation3], 0
    %s10 = scalar_lea.sflag [#allocation3], 1
    %11 = vsyncpa %s10, 0
    loop: start=0, step=1, limit=4
    $region2: #{tpu_custom_call.1} parent=1 // loop_pre_header
      _
    $region3: #{tpu_custom_call.1} parent=1 // loop_header
      %s13 = sphi 0, %s17
      %p14 = scmp.ge.s32.totalorder %s13, 4
      %s20 = sphi 0, %s32
      %s21 = sphi 0, %s28
      %s22 = sphi 0, %s20
      %s23 = sphi 0, %s21
      %s24 = sphi 0, %s22
      %s25 = sphi 0, %s23
      %s35 = sphi 0, %s37
      %s38 = sphi 0, %s35
      %s39 = sphi 0, %s38
      %s55 = sphi 0, %s39
      %s59 = sphi 0, %s59
      %s61 = sphi 0, %s59
      %s62 = sphi 0, %s61
      %s76 = sphi 0, %s62
      %s82 = sphi 0, %s84
      %s85 = sphi 0, %s82
      %s86 = sphi 0, %s85
      %s102 = sphi 0, %s86
      %s108 = sphi 0, %s110
      %s111 = sphi 0, %s108
      %s112 = sphi 0, %s111
      %s128 = sphi 0, %s112
      %s136 = sphi 0, %s138
      %s139 = sphi 0, %s136
      %s140 = sphi 0, %s139
      %s156 = sphi 0, %s140
    $region4: #{tpu_custom_call.1} parent=1 // loop_header_branch
      %16 = sbr.rel (%p14) target = $region8
    $region5: #{tpu_custom_call.1} parent=1 // loop_body
      %s18 = ssub.s32 %s13, 1
      %s19 = ssub.s32 %s13, 2
      %s26 = sadd.s32 1, %s21
      %p27 = scmp.ge.s32.totalorder %s26, 1
      %s28 = scalar_select %p27, 0, %s26
      %s29 = sadd.s32 1, %s20
      %s30 = scalar_select %p27, %s29, %s20
      %p31 = scmp.ge.s32.totalorder %s30, 2
      %s32 = scalar_select %p31, 0, %s30
      %s33 = ssub.s32 %s20, %s32
      %p34 = scmp.eq.s32.totalorder %s33, 0
      %s36 = sadd.s32 %s35, 1
      %s37 = scalar_select %p34, %s35, %s36
      %p40 = pneg %p34
      %p41 = scmp.eq.s32.totalorder %s13, 1
      %p42 = por %p40, %p41
      %p43 = scmp.ne.s32.totalorder %s35, %s38
      %p44 = scmp.eq.s32.totalorder %s13, 0
      %p45 = por %p43, %p44
      %p46 = scmp.ne.s32.totalorder %s35, %s38
      %p47 = scmp.eq.s32.totalorder %s18, 1
      %p48 = por %p46, %p47
      %p49 = scmp.ne.s32.totalorder %s38, %s39
      %p50 = scmp.eq.s32.totalorder %s18, 0
      %p51 = por %p49, %p50
      %p52 = scmp.ne.s32.totalorder %s38, %s39
      %p53 = scmp.eq.s32.totalorder %s19, 1
      %p54 = por %p52, %p53
      %p56 = scmp.ne.s32.totalorder %s39, %s55
      %p57 = scmp.eq.s32.totalorder %s19, 0
      %p58 = por %p56, %p57
      %s60 = sadd.s32 %s59, 1
      %p63 = scmp.eq.s32.totalorder %s13, 1
      %p64 = scmp.ne.s32.totalorder %s59, %s61
      %p65 = scmp.eq.s32.totalorder %s13, 0
      %p66 = por %p64, %p65
      %p67 = scmp.ne.s32.totalorder %s59, %s61
      %p68 = scmp.eq.s32.totalorder %s18, 1
      %p69 = por %p67, %p68
      %p70 = scmp.ne.s32.totalorder %s61, %s62
      %p71 = scmp.eq.s32.totalorder %s18, 0
      %p72 = por %p70, %p71
      %p73 = scmp.ne.s32.totalorder %s61, %s62
      %p74 = scmp.eq.s32.totalorder %s19, 1
      %p75 = por %p73, %p74
      %p77 = scmp.ne.s32.totalorder %s62, %s76
      %p78 = scmp.eq.s32.totalorder %s19, 0
      %p79 = por %p77, %p78
      %s80 = ssub.s32 %s21, %s28
      %p81 = scmp.eq.s32.totalorder %s80, 0
      %s83 = sadd.s32 %s82, 1
      %s84 = scalar_select %p81, %s82, %s83
      %p87 = pneg %p81
      %p88 = scmp.eq.s32.totalorder %s13, 1
      %p89 = por %p87, %p88
      %p90 = scmp.ne.s32.totalorder %s82, %s85
      %p91 = scmp.eq.s32.totalorder %s13, 0
      %p92 = por %p90, %p91
      %p93 = scmp.ne.s32.totalorder %s82, %s85
      %p94 = scmp.eq.s32.totalorder %s18, 1
      %p95 = por %p93, %p94
      %p96 = scmp.ne.s32.totalorder %s85, %s86
      %p97 = scmp.eq.s32.totalorder %s18, 0
      %p98 = por %p96, %p97
      %p99 = scmp.ne.s32.totalorder %s85, %s86
      %p100 = scmp.eq.s32.totalorder %s19, 1
      %p101 = por %p99, %p100
      %p103 = scmp.ne.s32.totalorder %s86, %s102
      %p104 = scmp.eq.s32.totalorder %s19, 0
      %p105 = por %p103, %p104
      %s106 = ssub.s32 %s21, %s28
      %p107 = scmp.eq.s32.totalorder %s106, 0
      %s109 = sadd.s32 %s108, 1
      %s110 = scalar_select %p107, %s108, %s109
      %p113 = pneg %p107
      %p114 = scmp.eq.s32.totalorder %s13, 1
      %p115 = por %p113, %p114
      %p116 = scmp.ne.s32.totalorder %s108, %s111
      %p117 = scmp.eq.s32.totalorder %s13, 0
      %p118 = por %p116, %p117
      %p119 = scmp.ne.s32.totalorder %s108, %s111
      %p120 = scmp.eq.s32.totalorder %s18, 1
      %p121 = por %p119, %p120
      %p122 = scmp.ne.s32.totalorder %s111, %s112
      %p123 = scmp.eq.s32.totalorder %s18, 0
      %p124 = por %p122, %p123
      %p125 = scmp.ne.s32.totalorder %s111, %s112
      %p126 = scmp.eq.s32.totalorder %s19, 1
      %p127 = por %p125, %p126
      %p129 = scmp.ne.s32.totalorder %s112, %s128
      %p130 = scmp.eq.s32.totalorder %s19, 0
      %p131 = por %p129, %p130
      %s132 = ssub.s32 %s20, %s32
      %s133 = ssub.s32 %s21, %s28
      %s134 = sor.u32 %s132, %s133
      %p135 = scmp.eq.s32.totalorder %s134, 0
      %s137 = sadd.s32 %s136, 1
      %s138 = scalar_select %p135, %s136, %s137
      %p141 = pneg %p135
      %p142 = scmp.eq.s32.totalorder %s13, 1
      %p143 = por %p141, %p142
      %p144 = scmp.ne.s32.totalorder %s136, %s139
      %p145 = scmp.eq.s32.totalorder %s13, 0
      %p146 = por %p144, %p145
      %p147 = scmp.ne.s32.totalorder %s136, %s139
      %p148 = scmp.eq.s32.totalorder %s18, 1
      %p149 = por %p147, %p148
      %p150 = scmp.ne.s32.totalorder %s139, %s140
      %p151 = scmp.eq.s32.totalorder %s18, 0
      %p152 = por %p150, %p151
      %p153 = scmp.ne.s32.totalorder %s139, %s140
      %p154 = scmp.eq.s32.totalorder %s19, 1
      %p155 = por %p153, %p154
      %p157 = scmp.ne.s32.totalorder %s140, %s156
      %p158 = scmp.eq.s32.totalorder %s19, 0
      %p159 = por %p157, %p158
      %p160 = scmp.le.s32.totalorder 1, %s13
      %p161 = scmp.lt.s32.totalorder %s13, 3
      %p162 = pnand %p160, %p161
      %p163 = pneg %p162
      // Predicated region
      $region9: #{tpu_custom_call.1} parent=5 // pred_check
        _
      $region10: #{tpu_custom_call.1} parent=5 // pred_check_branch
        %165 = sbr.rel (%p162) target = $region12
      $region11: #{tpu_custom_call.1} parent=5 // pred_region
        %s166 = ssub.s32 %s13, 1
        // Predicated region
        $region13: #{tpu_custom_call.1} parent=11 // pred_check
          %p167 = pneg %p72
        $region14: #{tpu_custom_call.1} parent=11 // pred_check_branch
          %169 = sbr.rel (%p167) target = $region16
        $region15: #{tpu_custom_call.1} parent=11 // pred_region
          _
        $region16: #{tpu_custom_call.1} parent=11 // pred_fallthru
          _
        // Predicated region
        $region17: #{tpu_custom_call.1} parent=11 // pred_check
          %p170 = pneg %p98
        $region18: #{tpu_custom_call.1} parent=11 // pred_check_branch
          %172 = sbr.rel (%p170) target = $region20
        $region19: #{tpu_custom_call.1} parent=11 // pred_region
          %p173 = scmp.lt.s32.totalorder %s23, 0
          %s174 = scalar_select %p173, %s23, 0
          %s175 = smul.addr %s174, 8
          %s176 = scalar_lea.vmem %s2, %s175
        $region20: #{tpu_custom_call.1} parent=11 // pred_fallthru
          _
        // Predicated region
        $region21: #{tpu_custom_call.1} parent=11 // pred_check
          %p177 = pneg %p124
        $region22: #{tpu_custom_call.1} parent=11 // pred_check_branch
          %179 = sbr.rel (%p177) target = $region24
        $region23: #{tpu_custom_call.1} parent=11 // pred_region
          %p180 = scmp.lt.s32.totalorder %s23, 0
          %s181 = scalar_select %p180, %s23, 0
          %s182 = smul.addr %s181, 8
          %s183 = scalar_lea.vmem %s3, %s182
        $region24: #{tpu_custom_call.1} parent=11 // pred_fallthru
          _
      $region12: #{tpu_custom_call.1} parent=5 // pred_fallthru
        _
      %p184 = scmp.lt.s32.totalorder %s13, 2
      // Predicated region
      $region25: #{tpu_custom_call.1} parent=5 // pred_check
        %p185 = pneg %p184
      $region26: #{tpu_custom_call.1} parent=5 // pred_check_branch
        %187 = sbr.rel (%p185) target = $region28
      $region27: #{tpu_custom_call.1} parent=5 // pred_region
        // Predicated region
        $region29: #{tpu_custom_call.1} parent=27 // pred_check
          %p188 = pneg %p45
        $region30: #{tpu_custom_call.1} parent=27 // pred_check_branch
          %190 = sbr.rel (%p188) target = $region32
        $region31: #{tpu_custom_call.1} parent=27 // pred_region
          %p191 = scmp.lt.s32.totalorder %s20, 1
          %s192 = scalar_select %p191, %s20, 1
          %s193 = smul.addr %s192, 2
          %s194 = smul.addr %s193, 4
          %s195 = scalar_lea.vmem %s0, %s194
        $region32: #{tpu_custom_call.1} parent=27 // pred_fallthru
          _
      $region28: #{tpu_custom_call.1} parent=5 // pred_fallthru
        _
      %p196 = scmp.le.s32.totalorder 1, %s13
      %p197 = scmp.lt.s32.totalorder %s13, 3
      %p198 = pnand %p196, %p197
      %p199 = pneg %p198
      // Predicated region
      $region33: #{tpu_custom_call.1} parent=5 // pred_check
        _
      $region34: #{tpu_custom_call.1} parent=5 // pred_check_branch
        %201 = sbr.rel (%p198) target = $region36
      $region35: #{tpu_custom_call.1} parent=5 // pred_region
        %s202 = ssub.s32 %s13, 1
        %p203 = scmp.lt.s32.totalorder %s22, 1
        %s204 = scalar_select %p203, %s22, 1
        %s205 = smul.addr %s204, 2
        %s206 = smul.addr %s205, 4
        %s207 = scalar_lea.vmem %s0, %s206
        %p208 = pneg %p51
        %p209 = pneg %p48
        %p210 = pneg %p72
        %p211 = pneg %p69
        %p212 = scmp.lt.s32.totalorder %s23, 0
        %s213 = scalar_select %p212, %s23, 0
        %s214 = smul.addr %s213, 8
        %s215 = scalar_lea.vmem %s2, %s214
        %p216 = pneg %p98
        %p217 = pneg %p95
        %p218 = scmp.lt.s32.totalorder %s23, 0
        %s219 = scalar_select %p218, %s23, 0
        %s220 = smul.addr %s219, 8
        %s221 = scalar_lea.vmem %s3, %s220
        %p222 = pneg %p124
        %p223 = pneg %p121
        %p224 = pneg %p152
        %p225 = pneg %p149
        %s226 = sand.u32 %s139, 1
        %s227 = scalar_lea.sflag [#allocation3], %s226
        %s228 = sand.u32 %s139, 1
        %s229 = smul.addr %s228, 16
        %s230 = scalar_lea.vmem [#allocation2], %s229
        %p231 = scmp.lt.s32.totalorder %s22, 1
        %s232 = scalar_select %p231, %s22, 1
        %s233 = smul.addr %s232, 2
        %s234 = smul.addr %s233, 4
        %s235 = scalar_lea.vmem %s0, %s234
        %p236 = scmp.lt.s32.totalorder %s23, 0
        %s237 = scalar_select %p236, %s23, 0
        %s238 = smul.addr %s237, 8
        %s239 = scalar_lea.vmem %s2, %s238
        %p240 = scmp.lt.s32.totalorder %s23, 0
        %s241 = scalar_select %p240, %s23, 0
        %s242 = smul.addr %s241, 8
        %s243 = scalar_lea.vmem %s3, %s242
        %v244 = vld [vmem:[%s235] sm:$0xff]
        %v245 = vld [vmem:[%s1] sm:$0xf]
        %247 = vset.pattern.permute.xlu0 0
        %248 = vperm.xlu0 %247, %v245
        %v249 = vpop.permute.xlu0 %248
        %v251 = vunpack.c.l.s4 839922192
        %v252 = vunpack.c.0.s8 %v251
        %v253 = vlaneseq
        %v254 = vshrl.u32 %v253, 7
        %v255 = vsub.s32 %v252, %v254
        %v256 = vrot.slane %v249, %v255
        %v258 = vmul.f32 %v244, %v256
        %v260 = vcombine.high %v244, %v244
        %262 = vrot.lane.b32.xlu0 %v244, 127
        %v263 = vpop.permute.xlu0 %262
        %264 = vrot.lane.b32.xlu0 %v260, 127
        %v265 = vpop.permute.xlu0 %264
        %v266 = vlaneseq
        %v267 = vand.u32 %v266, 127
        %vm268 = vcmp.lt.s32.totalorder %v267, 127
        %v269 = vsel %vm268, %v263, %v265
        %v270 = vsel %vm268, %v265, %v263
        %271 = vset.pattern.permute.xlu0 1
        %272 = vperm.xlu0 %271, %v245
        %v273 = vpop.permute.xlu0 %272
        %v275 = vmul.f32 %v269, %v273
        %v276 = vmul.f32 %v270, %v273
        %v279 = vcombine.low %v275, %v276
        %v281 = vadd.f32 %v258, %v279
        %282 = vrot.lane.b32.xlu0 %v244, 126
        %v283 = vpop.permute.xlu0 %282
        %284 = vrot.lane.b32.xlu0 %v260, 126
        %v285 = vpop.permute.xlu0 %284
        %vm286 = vcmp.lt.s32.totalorder %v267, 126
        %v287 = vsel %vm286, %v283, %v285
        %v288 = vsel %vm286, %v285, %v283
        %289 = vset.pattern.permute.xlu0 2
        %290 = vperm.xlu0 %289, %v245
        %v291 = vpop.permute.xlu0 %290
        %v293 = vmul.f32 %v287, %v291
        %v294 = vmul.f32 %v288, %v291
        %v297 = vcombine.low %v293, %v294
        %v299 = vadd.f32 %v281, %v297
        %300 = vrot.lane.b32.xlu0 %v244, 112
        %v301 = vpop.permute.xlu0 %300
        %302 = vrot.lane.b32.xlu0 %v260, 112
        %v303 = vpop.permute.xlu0 %302
        %vm304 = vcmp.lt.s32.totalorder %v267, 112
        %v305 = vsel %vm304, %v301, %v303
        %v306 = vsel %vm304, %v303, %v301
        %307 = vset.pattern.permute.xlu0 3
        %308 = vperm.xlu0 %307, %v245
        %v309 = vpop.permute.xlu0 %308
        %v311 = vmul.f32 %v305, %v309
        %v312 = vmul.f32 %v306, %v309
        %v315 = vcombine.low %v311, %v312
        %v317 = vadd.f32 %v299, %v315
        %318 = vrot.lane.b32.xlu0 %v244, 111
        %v319 = vpop.permute.xlu0 %318
        %320 = vrot.lane.b32.xlu0 %v260, 111
        %v321 = vpop.permute.xlu0 %320
        %vm322 = vcmp.lt.s32.totalorder %v267, 111
        %v323 = vsel %vm322, %v319, %v321
        %v324 = vsel %vm322, %v321, %v319
        %325 = vset.pattern.permute.xlu0 4
        %326 = vperm.xlu0 %325, %v245
        %v327 = vpop.permute.xlu0 %326
        %v329 = vmul.f32 %v323, %v327
        %v330 = vmul.f32 %v324, %v327
        %v333 = vcombine.low %v329, %v330
        %v335 = vadd.f32 %v317, %v333
        %336 = vrot.lane.b32.xlu0 %v244, 110
        %v337 = vpop.permute.xlu0 %336
        %338 = vrot.lane.b32.xlu0 %v260, 110
        %v339 = vpop.permute.xlu0 %338
        %vm340 = vcmp.lt.s32.totalorder %v267, 110
        %v341 = vsel %vm340, %v337, %v339
        %v342 = vsel %vm340, %v339, %v337
        %343 = vset.pattern.permute.xlu0 5
        %344 = vperm.xlu0 %343, %v245
        %v345 = vpop.permute.xlu0 %344
        %v347 = vmul.f32 %v341, %v345
        %v348 = vmul.f32 %v342, %v345
        %v351 = vcombine.low %v347, %v348
        %v353 = vadd.f32 %v335, %v351
        %354 = vrot.lane.b32.xlu0 %v244, 96
        %v355 = vpop.permute.xlu0 %354
        %356 = vrot.lane.b32.xlu0 %v260, 96
        %v357 = vpop.permute.xlu0 %356
        %vm358 = vcmp.lt.s32.totalorder %v267, 96
        %v359 = vsel %vm358, %v355, %v357
        %v360 = vsel %vm358, %v357, %v355
        %361 = vset.pattern.permute.xlu0 6
        %362 = vperm.xlu0 %361, %v245
        %v363 = vpop.permute.xlu0 %362
        %v365 = vmul.f32 %v359, %v363
        %v366 = vmul.f32 %v360, %v363
        %v369 = vcombine.low %v365, %v366
        %v371 = vadd.f32 %v353, %v369
        %372 = vrot.lane.b32.xlu0 %v244, 95
        %v373 = vpop.permute.xlu0 %372
        %374 = vrot.lane.b32.xlu0 %v260, 95
        %v375 = vpop.permute.xlu0 %374
        %vm376 = vcmp.lt.s32.totalorder %v267, 95
        %v377 = vsel %vm376, %v373, %v375
        %v378 = vsel %vm376, %v375, %v373
        %379 = vset.pattern.permute.xlu0 7
        %380 = vperm.xlu0 %379, %v245
        %v381 = vpop.permute.xlu0 %380
        %v383 = vmul.f32 %v377, %v381
        %v384 = vmul.f32 %v378, %v381
        %v387 = vcombine.low %v383, %v384
        %v389 = vadd.f32 %v371, %v387
        %390 = vrot.lane.b32.xlu0 %v244, 94
        %v391 = vpop.permute.xlu0 %390
        %392 = vrot.lane.b32.xlu0 %v260, 94
        %v393 = vpop.permute.xlu0 %392
        %vm394 = vcmp.lt.s32.totalorder %v267, 94
        %v395 = vsel %vm394, %v391, %v393
        %v396 = vsel %vm394, %v393, %v391
        %397 = vset.pattern.permute.xlu0 8
        %398 = vperm.xlu0 %397, %v245
        %v399 = vpop.permute.xlu0 %398
        %v401 = vmul.f32 %v395, %v399
        %v402 = vmul.f32 %v396, %v399
        %v405 = vcombine.low %v401, %v402
        %v407 = vadd.f32 %v389, %v405
        %v408 = vld [vmem:[%s239] sm:$0xff]
        %v409 = vld [vmem:[%s243] sm:$0xff]
        %411 = vset.pattern.permute.xlu0 0
        %412 = vperm.xlu0 %411, %v409
        %v413 = vpop.permute.xlu0 %412
        %v416 = vcombine.high %v407, %v407
        %vm417 = vcmask 31744
        %v419 = vsel %vm417, %v408, 0
        %vm421 = vcmask 1043456
        %v422 = vsel %vm421, %v407, 0
        %v424 = vsel %vm421, %v416, 0
        %426 = vmatprep.subr.mxu0 %v424
        %427 = vmatpush1.msra.mxu0 %v422
        %428 = vmatprep.subr.mxu0 0.0
        %429 = vmatpush1.msra.mxu0 0.0
        %430 = vmatprep.subr.mxu0 0.0
        %431 = vmatpush1.msra.mxu0 0.0
        %432 = vmatprep.subr.mxu0 0.0
        %433 = vmatpush1.msra.mxu0 0.0
        %434 = vmatprep.subr.mxu0 0.0
        %435 = vmatpush1.msra.mxu0 0.0
        %436 = vmatprep.subr.mxu0 0.0
        %437 = vmatpush1.msra.mxu0 0.0
        %438 = vmatprep.subr.mxu0 0.0
        %439 = vmatpush1.msra.mxu0 0.0
        %440 = vmatprep.subr.mxu0 0.0
        %441 = vmatpush1.msra.mxu0 0.0
        %442 = vmatprep.subr.mxu0 0.0
        %443 = vmatpush1.msra.mxu0 0.0
        %444 = vmatprep.subr.mxu0 0.0
        %445 = vmatpush1.msra.mxu0 0.0
        %446 = vmatprep.subr.mxu0 0.0
        %447 = vmatpush1.msra.mxu0 0.0
        %448 = vmatprep.subr.mxu0 0.0
        %449 = vmatpush1.msra.mxu0 0.0
        %450 = vmatprep.subr.mxu0 0.0
        %451 = vmatpush1.msra.mxu0 0.0
        %452 = vmatprep.subr.mxu0 0.0
        %453 = vmatpush1.msra.mxu0 0.0
        %454 = vmatprep.subr.mxu0 0.0
        %455 = vmatpush1.msra.mxu0 0.0
        %456 = vmatprep.subr.mxu0 0.0
        %457 = vmatpush1.msra.mxu0 0.0
        %458 = vmatprep.subr.mxu0 0.0
        %459 = vmatpush1.msra.mxu0 0.0
        %460 = vmatprep.subr.mxu0 0.0
        %461 = vmatpush1.msra.mxu0 0.0
        %462 = vmatprep.subr.mxu0 0.0
        %463 = vmatpush1.msra.mxu0 0.0
        %464 = vmatprep.subr.mxu0 0.0
        %465 = vmatpush1.msra.mxu0 0.0
        %466 = vmatprep.subr.mxu0 0.0
        %467 = vmatpush1.msra.mxu0 0.0
        %468 = vmatprep.subr.mxu0 0.0
        %469 = vmatpush1.msra.mxu0 0.0
        %470 = vmatprep.subr.mxu0 0.0
        %471 = vmatpush1.msra.mxu0 0.0
        %472 = vmatprep.subr.mxu0 0.0
        %473 = vmatpush1.msra.mxu0 0.0
        %474 = vmatprep.subr.mxu0 0.0
        %475 = vmatpush1.msra.mxu0 0.0
        %476 = vmatprep.subr.mxu0 0.0
        %477 = vmatpush1.msra.mxu0 0.0
        %478 = vmatprep.subr.mxu0 0.0
        %479 = vmatpush1.msra.mxu0 0.0
        %480 = vmatprep.subr.mxu0 0.0
        %481 = vmatpush1.msra.mxu0 0.0
        %482 = vmatprep.subr.mxu0 0.0
        %483 = vmatpush1.msra.mxu0 0.0
        %484 = vmatprep.subr.mxu0 0.0
        %485 = vmatpush1.msra.mxu0 0.0
        %486 = vmatprep.subr.mxu0 0.0
        %487 = vmatpush1.msra.mxu0 0.0
        %488 = vmatprep.subr.mxu0 0.0
        %489 = vmatpush1.msra.mxu0 0.0
        %490 = vmatprep.mubr.f32.mxu0 0.0
        %491 = vmatmul.mubr.f32.gmra.mrb[0].mxu0 %v419
        %v492 = vpop.f32.mrb[0].mxu0
        %v493 = vadd.f32 %v413, %v492
        %v494 = vpop.f32.mrb[0].mxu0
        %v495 = vadd.f32 %v413, %v494
        %496 = vdwg.mxu0
        %497 = vst [vmem:[%s230] sm:$0xff] %v493
        %498 = vst [vmem:[%s230 + $0x8] sm:$0xff] %v495
        %s499 = sand.u32 %s139, 1
        %s500 = scalar_lea.sflag [#allocation3], %s499
        %s501 = sand.u32 %s139, 1
        %s502 = smul.addr %s501, 16
        %s503 = scalar_lea.vmem [#allocation2], %s502
        // Predicated region
        $region37: #{tpu_custom_call.1} parent=35 // pred_check
          %p504 = pneg %p149
        $region38: #{tpu_custom_call.1} parent=35 // pred_check_branch
          %506 = sbr.rel (%p504) target = $region40
        $region39: #{tpu_custom_call.1} parent=35 // pred_region
          %s508 = ssub.s32 256, 256
          %509 = vsyncadd %s500, %s508
          %s510 = smul.addr %s23, 2
          %s511 = smul.addr %s22, 2
          %s512 = sadd.s32 %s510, %s511
          %s513 = smul.addr %s512, 128
          %s514 = scalar_lea.hbm %s4, %s513
          %s516 = sshll.u32 %s503, 4
          %s517 = int_to_ptr.vmem [resolvable:$true] %s516
          %519 = dma.vmem_to_hbm [thread:$0]  %s517, 256, %s514, %s500
        $region40: #{tpu_custom_call.1} parent=35 // pred_fallthru
          _
      $region36: #{tpu_custom_call.1} parent=5 // pred_fallthru
        _
      %p520 = scmp.le.s32.totalorder 2, %s13
      // Predicated region
      $region41: #{tpu_custom_call.1} parent=5 // pred_check
        %p521 = pneg %p520
      $region42: #{tpu_custom_call.1} parent=5 // pred_check_branch
        %523 = sbr.rel (%p521) target = $region44
      $region43: #{tpu_custom_call.1} parent=5 // pred_region
        %s524 = ssub.s32 %s13, 2
        // Predicated region
        $region45: #{tpu_custom_call.1} parent=43 // pred_check
          %p525 = pneg %p155
        $region46: #{tpu_custom_call.1} parent=43 // pred_check_branch
          %527 = sbr.rel (%p525) target = $region48
        $region47: #{tpu_custom_call.1} parent=43 // pred_region
          %s528 = sand.u32 %s140, 1
          %s529 = scalar_lea.sflag [#allocation3], %s528
          %s530 = sand.u32 %s140, 1
          %s531 = smul.addr %s530, 16
          %s532 = scalar_lea.vmem [#allocation2], %s531
          %533 = dma.done %s529, 256
        $region48: #{tpu_custom_call.1} parent=43 // pred_fallthru
          _
      $region44: #{tpu_custom_call.1} parent=5 // pred_fallthru
        _
    $region6: #{tpu_custom_call.1} parent=1 // loop_footer
      %s17 = sadd.s32 1, %s13
    $region7: #{tpu_custom_call.1} parent=1 // loop_footer_branch
      %12 = sbr.rel target = $region3
    $region8: #{tpu_custom_call.1} parent=1 // loop_exit
      _
    %534 = vsyncpa [#allocation3], 1
    %s535 = scalar_lea.sflag [#allocation3], 1
    %536 = vsyncpa %s535, 1

</llo_original>
